<compile_context>
chip_gen: v6e
topology: v6e:2x2x1
jax: 0.10.0
libtpu: 0.0.40
codegen_flags: <defaults>
</compile_context>

<pallas_src>
import jax
import jax.numpy as jnp
from jax.experimental import pallas as pl
from jax.experimental.pallas import tpu as pltpu


def _round_up(x, m):
    return ((x + m - 1) // m) * m


def mlp_kernel(x_ref, w1_ref, b1_ref, w2_ref, b2_ref,
               w3_ref, b3_ref, w4_ref, b4_ref, o_ref):
    # x arrives f32; cast to bf16 in-kernel (effectively free under the MXU).
    x = x_ref[...].astype(w1_ref.dtype)
    # fc1 + relu : bf16 operands, f32 accumulation, f32 epilogue
    h = jnp.dot(x, w1_ref[...], preferred_element_type=jnp.float32)
    h = jnp.maximum(h + b1_ref[...], 0.0)
    # fc2 + relu (+ dropout -> identity at inference)
    h = jnp.dot(h.astype(w2_ref.dtype), w2_ref[...],
                preferred_element_type=jnp.float32)
    h = jnp.maximum(h + b2_ref[...], 0.0)
    # TODO(synk): training-mode dropout(p=0.3) would need pltpu.prng_*; eval mode is identity.
    # fc3 + relu
    h = jnp.dot(h.astype(w3_ref.dtype), w3_ref[...],
                preferred_element_type=jnp.float32)
    h = jnp.maximum(h + b3_ref[...], 0.0)
    # fc4 (no activation)
    y = jnp.dot(h.astype(w4_ref.dtype), w4_ref[...],
                preferred_element_type=jnp.float32) + b4_ref[...]
    o_ref[...] = y.astype(o_ref.dtype)


def prepare_params(params):
    """One-time layout prep (hoisted OUT of the per-call path).

    Zero-pads every weight/bias to lane-dense multiples of 128 and casts the
    weights to bf16 (MXU-native, half the DMA bytes).  Biases stay f32 for the
    f32 bias+ReLU epilogue (no bf16 VPU on v5e).  Call once at init and reuse.
    """
    d_in, hidden = params["w1"].shape
    d_out = params["w4"].shape[1]
    Dp_in = _round_up(d_in, 128)
    Hp = _round_up(hidden, 128)
    Dp_out = _round_up(d_out, 128)

    def pad2(a, r, c):
        return jnp.pad(a, ((0, r - a.shape[0]), (0, c - a.shape[1])))

    bf16 = jnp.bfloat16
    return dict(
        w1=pad2(params["w1"], Dp_in, Hp).astype(bf16),
        w2=pad2(params["w2"], Hp, Hp).astype(bf16),
        w3=pad2(params["w3"], Hp, Hp).astype(bf16),
        w4=pad2(params["w4"], Hp, Dp_out).astype(bf16),
        b1=pad2(params["b1"], 1, Hp),
        b2=pad2(params["b2"], 1, Hp),
        b3=pad2(params["b3"], 1, Hp),
        b4=pad2(params["b4"], 1, Dp_out),
        dims=(d_in, hidden, d_out, Dp_in, Hp, Dp_out),
    )


def simple_nn_forward(x, prep, *, max_tile=512):
    """x: (B, d_in) float32. prep: output of prepare_params (cached across calls)."""
    B, d_in_x = x.shape
    d_in, hidden, d_out, Dp_in, Hp, Dp_out = prep["dims"]
    assert d_in_x == d_in, (d_in_x, d_in)

    # ---- batch tiling ----
    # For B >= 128 pick a tile giving >= 2 even grid steps so the "parallel" batch
    # axis can shard across v7x's 2 TensorCores; tiles up to 512 rows amortize the
    # ~0.35us/step overhead and fill the MXU M dimension on v6e/v7x.
    if B >= 128:
        tb = min(max_tile, _round_up((B + 1) // 2, 16))
    else:
        tb = _round_up(B, 16)
    Bp = _round_up(B, tb)
    grid = (Bp // tb,)

    # x stays f32 (cast to bf16 inside the kernel); pad only if actually needed.
    if (Bp, Dp_in) != (B, d_in_x):
        x = jnp.pad(x, ((0, Bp - B), (0, Dp_in - d_in_x)))

    # ---- scheduler hints ----
    w_bytes = 2 * (Dp_in * Hp + 2 * Hp * Hp + Hp * Dp_out)     # bf16 weights
    b_bytes = 4 * (3 * Hp + Dp_out)                            # f32 biases
    flops = 2 * Bp * (Dp_in * Hp + 2 * Hp * Hp + Hp * Dp_out)
    bytes_accessed = w_bytes + b_bytes + 4 * Bp * (Dp_in + Dp_out)
    cost = pl.CostEstimate(flops=flops, transcendentals=0,
                           bytes_accessed=bytes_accessed)

    vmem_bytes = (w_bytes + b_bytes                 # single-buffered resident weights/biases
                  + 2 * 4 * tb * (Dp_in + Dp_out)   # double-buffered x/out tiles (f32)
                  + 6 * 4 * tb * Hp)                # headroom for f32 activations
    vmem_limit = int(min(100 << 20, max(16 << 20, 2 * vmem_bytes)))

    # Resident operands: block index never changes -> single-buffer them.
    resident = lambda shape: pl.BlockSpec(shape, lambda i: (0, 0),
                                          pipeline_mode=pl.Buffered(1))
    # TODO(synk): if hidden ever scales past ~2K, add an "arbitrary" K/N grid axis with
    # an f32 VMEM accumulator (init/finalize via pl.when) so the (Hp,Hp) weights are
    # streamed instead of resident (v7x 64 MiB VMEM is the first to break).

    out_padded = pl.pallas_call(
        mlp_kernel,
        out_shape=jax.ShapeDtypeStruct((Bp, Dp_out), x.dtype),
        grid_spec=pltpu.PrefetchScalarGridSpec(
            num_scalar_prefetch=0,
            grid=grid,
            in_specs=[
                pl.BlockSpec((tb, Dp_in), lambda i: (i, 0)),     # x tile (rides the grid)
                resident((Dp_in, Hp)),  resident((1, Hp)),       # fc1 (resident, 1-buffered)
                resident((Hp, Hp)),     resident((1, Hp)),       # fc2
                resident((Hp, Hp)),     resident((1, Hp)),       # fc3
                resident((Hp, Dp_out)), resident((1, Dp_out)),   # fc4
            ],
            out_specs=pl.BlockSpec((tb, Dp_out), lambda i: (i, 0)),
        ),
        compiler_params=pltpu.CompilerParams(
            dimension_semantics=("parallel",),
            vmem_limit_bytes=vmem_limit),
        cost_estimate=cost,
    )(x, prep["w1"], prep["b1"], prep["w2"], prep["b2"],
      prep["w3"], prep["b3"], prep["w4"], prep["b4"])

    return out_padded[:B, :d_out]


def init_params(key, d_in, hidden, d_out, dtype=jnp.float32):
    """Deterministic init mimicking nn.Linear's uniform(-1/sqrt(fan_in), +...)."""
    ks = jax.random.split(key, 8)

    def linear(kw, kb, fan_in, fan_out):
        bound = 1.0 / jnp.sqrt(fan_in)
        w = jax.random.uniform(kw, (fan_in, fan_out), dtype, -bound, bound)
        b = jax.random.uniform(kb, (1, fan_out), dtype, -bound, bound)
        return w, b

    w1, b1 = linear(ks[0], ks[1], d_in, hidden)
    w2, b2 = linear(ks[2], ks[3], hidden, hidden)
    w3, b3 = linear(ks[4], ks[5], hidden, hidden)
    w4, b4 = linear(ks[6], ks[7], hidden, d_out)
    return dict(w1=w1, b1=b1, w2=w2, b2=b2, w3=w3, b3=b3, w4=w4, b4=b4)


def reference_forward(x, p):
    """Pure-JAX reference using the same bf16-operand / f32-accumulate recipe."""
    bf = jnp.bfloat16
    lin = lambda h, w, b: jnp.dot(h.astype(bf), w.astype(bf),
                                  preferred_element_type=jnp.float32) + b
    relu = lambda t: jnp.maximum(t, 0.0)
    h = relu(lin(x, p["w1"], p["b1"]))
    h = relu(lin(h, p["w2"], p["b2"]))     # dropout == identity in eval
    h = relu(lin(h, p["w3"], p["b3"]))
    return lin(h, p["w4"], p["b4"])


if __name__ == "__main__":
    # Small shapes consistent with the module (Linear in -> 64 -> 64 -> 64 -> out).
    batch, d_in, hidden, d_out = 16, 128, 64, 128
    key = jax.random.PRNGKey(0)
    kx, kp = jax.random.split(key)

    x = jax.random.normal(kx, (batch, d_in), dtype=jnp.float32)
    params = init_params(kp, d_in, hidden, d_out)

    # Layout prep happens ONCE; only x is handled per call.
    prep = prepare_params(params)
    prep = jax.tree_util.tree_map(
        lambda a: jax.block_until_ready(a) if isinstance(a, jax.Array) else a, prep)

    out = simple_nn_forward(x, prep)
    out = jax.block_until_ready(out)

    ref = reference_forward(x, params)
    assert out.shape == (batch, d_out)
    assert jnp.allclose(out, ref, atol=1e-2, rtol=1e-2), \
        float(jnp.max(jnp.abs(out - ref)))
    print("KERNEL_OK")
</pallas_src>

<mosaic_0001>
module attributes {stable_mosaic.version = 11 : i64} {
  func.func @mlp_kernel(%arg0: i32, %arg1: memref<16x128xf32, #tpu.memory_space<vmem>>, %arg2: memref<128x128xbf16, #tpu.memory_space<vmem>>, %arg3: memref<1x128xf32, #tpu.memory_space<vmem>>, %arg4: memref<128x128xbf16, #tpu.memory_space<vmem>>, %arg5: memref<1x128xf32, #tpu.memory_space<vmem>>, %arg6: memref<128x128xbf16, #tpu.memory_space<vmem>>, %arg7: memref<1x128xf32, #tpu.memory_space<vmem>>, %arg8: memref<128x128xbf16, #tpu.memory_space<vmem>>, %arg9: memref<1x128xf32, #tpu.memory_space<vmem>>, %arg10: memref<16x128xf32, #tpu.memory_space<vmem>>) attributes {dimension_semantics = [#tpu.dimension_semantics<parallel>], iteration_bounds = array<i64: 1>, scalar_prefetch = 0 : i64, scratch_operands = 0 : i64, tpu.core_type = #tpu.core_type<tc>, window_params = [{transform_indices = @transform_0, window_bounds = array<i64: 16, 128>}, {pipeline_mode = #tpu.pipeline_mode<synchronous>, transform_indices = @transform_1, window_bounds = array<i64: 128, 128>}, {pipeline_mode = #tpu.pipeline_mode<synchronous>, transform_indices = @transform_2, window_bounds = array<i64: 1, 128>}, {pipeline_mode = #tpu.pipeline_mode<synchronous>, transform_indices = @transform_3, window_bounds = array<i64: 128, 128>}, {pipeline_mode = #tpu.pipeline_mode<synchronous>, transform_indices = @transform_4, window_bounds = array<i64: 1, 128>}, {pipeline_mode = #tpu.pipeline_mode<synchronous>, transform_indices = @transform_5, window_bounds = array<i64: 128, 128>}, {pipeline_mode = #tpu.pipeline_mode<synchronous>, transform_indices = @transform_6, window_bounds = array<i64: 1, 128>}, {pipeline_mode = #tpu.pipeline_mode<synchronous>, transform_indices = @transform_7, window_bounds = array<i64: 128, 128>}, {pipeline_mode = #tpu.pipeline_mode<synchronous>, transform_indices = @transform_8, window_bounds = array<i64: 1, 128>}, {transform_indices = @transform_9, window_bounds = array<i64: 16, 128>}]} {
    %c0 = arith.constant 0 : index
    %c0_0 = arith.constant 0 : index
    %0 = vector.load %arg1[%c0, %c0_0] : memref<16x128xf32, #tpu.memory_space<vmem>>, vector<16x128xf32>
    %1 = arith.truncf %0 : vector<16x128xf32> to vector<16x128xbf16>
    %c0_1 = arith.constant 0 : index
    %c0_2 = arith.constant 0 : index
    %2 = vector.load %arg2[%c0_1, %c0_2] : memref<128x128xbf16, #tpu.memory_space<vmem>>, vector<128x128xbf16>
    %cst = arith.constant dense<0.000000e+00> : vector<16x128xf32>
    %3 = tpu.matmul %1, %2, %cst {dimension_numbers = #tpu.dot_dimension_numbers<[1], [0], [0], [1], [0, 0, 1, 1], [], []>} : vector<16x128xbf16>, vector<128x128xbf16>, vector<16x128xf32> -> vector<16x128xf32>
    %c0_3 = arith.constant 0 : index
    %c0_4 = arith.constant 0 : index
    %4 = vector.load %arg3[%c0_3, %c0_4] : memref<1x128xf32, #tpu.memory_space<vmem>>, vector<1x128xf32>
    %5 = vector.broadcast %4 : vector<1x128xf32> to vector<16x128xf32>
    %6 = arith.addf %3, %5 : vector<16x128xf32>
    %cst_5 = arith.constant 0.000000e+00 : f32
    %7 = vector.broadcast %cst_5 : f32 to vector<16x128xf32>
    %8 = arith.maximumf %6, %7 : vector<16x128xf32>
    %9 = arith.truncf %8 : vector<16x128xf32> to vector<16x128xbf16>
    %c0_6 = arith.constant 0 : index
    %c0_7 = arith.constant 0 : index
    %10 = vector.load %arg4[%c0_6, %c0_7] : memref<128x128xbf16, #tpu.memory_space<vmem>>, vector<128x128xbf16>
    %cst_8 = arith.constant dense<0.000000e+00> : vector<16x128xf32>
    %11 = tpu.matmul %9, %10, %cst_8 {dimension_numbers = #tpu.dot_dimension_numbers<[1], [0], [0], [1], [0, 0, 1, 1], [], []>} : vector<16x128xbf16>, vector<128x128xbf16>, vector<16x128xf32> -> vector<16x128xf32>
    %c0_9 = arith.constant 0 : index
    %c0_10 = arith.constant 0 : index
    %12 = vector.load %arg5[%c0_9, %c0_10] : memref<1x128xf32, #tpu.memory_space<vmem>>, vector<1x128xf32>
    %13 = vector.broadcast %12 : vector<1x128xf32> to vector<16x128xf32>
    %14 = arith.addf %11, %13 : vector<16x128xf32>
    %cst_11 = arith.constant 0.000000e+00 : f32
    %15 = vector.broadcast %cst_11 : f32 to vector<16x128xf32>
    %16 = arith.maximumf %14, %15 : vector<16x128xf32>
    %17 = arith.truncf %16 : vector<16x128xf32> to vector<16x128xbf16>
    %c0_12 = arith.constant 0 : index
    %c0_13 = arith.constant 0 : index
    %18 = vector.load %arg6[%c0_12, %c0_13] : memref<128x128xbf16, #tpu.memory_space<vmem>>, vector<128x128xbf16>
    %cst_14 = arith.constant dense<0.000000e+00> : vector<16x128xf32>
    %19 = tpu.matmul %17, %18, %cst_14 {dimension_numbers = #tpu.dot_dimension_numbers<[1], [0], [0], [1], [0, 0, 1, 1], [], []>} : vector<16x128xbf16>, vector<128x128xbf16>, vector<16x128xf32> -> vector<16x128xf32>
    %c0_15 = arith.constant 0 : index
    %c0_16 = arith.constant 0 : index
    %20 = vector.load %arg7[%c0_15, %c0_16] : memref<1x128xf32, #tpu.memory_space<vmem>>, vector<1x128xf32>
    %21 = vector.broadcast %20 : vector<1x128xf32> to vector<16x128xf32>
    %22 = arith.addf %19, %21 : vector<16x128xf32>
    %cst_17 = arith.constant 0.000000e+00 : f32
    %23 = vector.broadcast %cst_17 : f32 to vector<16x128xf32>
    %24 = arith.maximumf %22, %23 : vector<16x128xf32>
    %25 = arith.truncf %24 : vector<16x128xf32> to vector<16x128xbf16>
    %c0_18 = arith.constant 0 : index
    %c0_19 = arith.constant 0 : index
    %26 = vector.load %arg8[%c0_18, %c0_19] : memref<128x128xbf16, #tpu.memory_space<vmem>>, vector<128x128xbf16>
    %cst_20 = arith.constant dense<0.000000e+00> : vector<16x128xf32>
    %27 = tpu.matmul %25, %26, %cst_20 {dimension_numbers = #tpu.dot_dimension_numbers<[1], [0], [0], [1], [0, 0, 1, 1], [], []>} : vector<16x128xbf16>, vector<128x128xbf16>, vector<16x128xf32> -> vector<16x128xf32>
    %c0_21 = arith.constant 0 : index
    %c0_22 = arith.constant 0 : index
    %28 = vector.load %arg9[%c0_21, %c0_22] : memref<1x128xf32, #tpu.memory_space<vmem>>, vector<1x128xf32>
    %29 = vector.broadcast %28 : vector<1x128xf32> to vector<16x128xf32>
    %30 = arith.addf %27, %29 : vector<16x128xf32>
    %c0_23 = arith.constant 0 : index
    %c0_24 = arith.constant 0 : index
    %31 = vector.load %arg10[%c0_23, %c0_24] : memref<16x128xf32, #tpu.memory_space<vmem>>, vector<16x128xf32>
    tpu.vector_store %arg10[%c0_23, %c0_24], %30 {strides = array<i32>} : memref<16x128xf32, #tpu.memory_space<vmem>>, vector<16x128xf32>,
    return
  }
  func.func @transform_0(%arg0: i32) -> (i32, i32) {
    %c0_i32 = arith.constant 0 : i32
    %c0_i32_0 = arith.constant 0 : i32
    return %arg0, %c0_i32 : i32, i32
  }
  func.func @transform_1(%arg0: i32) -> (i32, i32) {
    %c0_i32 = arith.constant 0 : i32
    %c0_i32_0 = arith.constant 0 : i32
    %c0_i32_1 = arith.constant 0 : i32
    return %c0_i32, %c0_i32_0 : i32, i32
  }
  func.func @transform_2(%arg0: i32) -> (i32, i32) {
    %c0_i32 = arith.constant 0 : i32
    %c0_i32_0 = arith.constant 0 : i32
    %c0_i32_1 = arith.constant 0 : i32
    return %c0_i32, %c0_i32_0 : i32, i32
  }
  func.func @transform_3(%arg0: i32) -> (i32, i32) {
    %c0_i32 = arith.constant 0 : i32
    %c0_i32_0 = arith.constant 0 : i32
    %c0_i32_1 = arith.constant 0 : i32
    return %c0_i32, %c0_i32_0 : i32, i32
  }
  func.func @transform_4(%arg0: i32) -> (i32, i32) {
    %c0_i32 = arith.constant 0 : i32
    %c0_i32_0 = arith.constant 0 : i32
    %c0_i32_1 = arith.constant 0 : i32
    return %c0_i32, %c0_i32_0 : i32, i32
  }
  func.func @transform_5(%arg0: i32) -> (i32, i32) {
    %c0_i32 = arith.constant 0 : i32
    %c0_i32_0 = arith.constant 0 : i32
    %c0_i32_1 = arith.constant 0 : i32
    return %c0_i32, %c0_i32_0 : i32, i32
  }
  func.func @transform_6(%arg0: i32) -> (i32, i32) {
    %c0_i32 = arith.constant 0 : i32
    %c0_i32_0 = arith.constant 0 : i32
    %c0_i32_1 = arith.constant 0 : i32
    return %c0_i32, %c0_i32_0 : i32, i32
  }
  func.func @transform_7(%arg0: i32) -> (i32, i32) {
    %c0_i32 = arith.constant 0 : i32
    %c0_i32_0 = arith.constant 0 : i32
    %c0_i32_1 = arith.constant 0 : i32
    return %c0_i32, %c0_i32_0 : i32, i32
  }
  func.func @transform_8(%arg0: i32) -> (i32, i32) {
    %c0_i32 = arith.constant 0 : i32
    %c0_i32_0 = arith.constant 0 : i32
    %c0_i32_1 = arith.constant 0 : i32
    return %c0_i32, %c0_i32_0 : i32, i32
  }
  func.func @transform_9(%arg0: i32) -> (i32, i32) {
    %c0_i32 = arith.constant 0 : i32
    %c0_i32_0 = arith.constant 0 : i32
    return %arg0, %c0_i32 : i32, i32
  }
}

</mosaic_0001>

<llo_original>
// kernel: tpu_custom_call.1
$region0: #{tpu_custom_call.1}
  #allocation0 [shape = 'u32[]', space=smem, size = 0x4, offset = 0x4, fixed_abs, tag = 'smem constant byte address 0x4 - core index']
  #allocation1 [shape = 'u32[144,128]{1,0:T(1,128)}', space=vmem, size = 0x12000, scoped, tag = 'internal scratch']
  %s0 = inlined_call_operand.hbm [shape: f32[16,128], index: 0, kind: input, shape index: {}]
  %s1 = inlined_call_operand.hbm [shape: bf16[128,128], index: 1, kind: input, shape index: {}]
  %s2 = inlined_call_operand.vmem [shape: f32[1,128], index: 2, kind: input, shape index: {}]
  %s3 = inlined_call_operand.hbm [shape: bf16[128,128], index: 3, kind: input, shape index: {}]
  %s4 = inlined_call_operand.vmem [shape: f32[1,128], index: 4, kind: input, shape index: {}]
  %s5 = inlined_call_operand.hbm [shape: bf16[128,128], index: 5, kind: input, shape index: {}]
  %s6 = inlined_call_operand.vmem [shape: f32[1,128], index: 6, kind: input, shape index: {}]
  %s7 = inlined_call_operand.hbm [shape: bf16[128,128], index: 7, kind: input, shape index: {}]
  %s8 = inlined_call_operand.vmem [shape: f32[1,128], index: 8, kind: input, shape index: {}]
  %s9 = inlined_call_operand.hbm [shape: f32[16,128], index: 9, kind: output, shape index: {}]
  %s10 = sld [smem:[#allocation0]]
  $region66: #{tpu_custom_call.1} parent=0
    _
  %s12 = ssub.s32 1, %s10
  %s13 = scalar_select 0, %s12, %s10
  $region1: #{tpu_custom_call.1} parent=0
    #allocation2 [shape = 'u8[8192]{0}', space=vmem, size = 0x2000, scoped, tag = 'input window, operand 0, single buffered']
    #allocation3 [shape = 's32[1]{0}', space=sflag, size = 0x4, scoped, tag = 'scoped memory for tpu_custom_call.1']
    #allocation4 [shape = 's32[1]{0}', space=sflag, size = 0x4, scoped, tag = 'scoped memory for tpu_custom_call.1']
    #allocation5 [shape = 'u8[32768]{0}', space=vmem, size = 0x8000, scoped, tag = 'input window, operand 1, single buffered']
    #allocation6 [shape = 's32[1]{0}', space=sflag, size = 0x4, scoped, tag = 'scoped memory for tpu_custom_call.1']
    #allocation7 [shape = 'u8[32768]{0}', space=vmem, size = 0x8000, scoped, tag = 'input window, operand 3, single buffered']
    #allocation8 [shape = 'u8[32768]{0}', space=vmem, size = 0x8000, scoped, tag = 'input window, operand 5, single buffered']
    #allocation9 [shape = 's32[1]{0}', space=sflag, size = 0x4, scoped, tag = 'scoped memory for tpu_custom_call.1']
    #allocation10 [shape = 'u8[32768]{0}', space=vmem, size = 0x8000, scoped, tag = 'input window, operand 7, single buffered']
    #allocation11 [shape = 'u8[8192]{0}', space=vmem, size = 0x2000, scoped, tag = 'output window, operand 0, single buffered']
    %14 = vsyncpa [#allocation3], 0
    %15 = vsyncpa [#allocation6], 0
    %16 = vsyncpa [#allocation9], 0
    %17 = vsyncpa [#allocation4], 0
    // Predicated region
    $region2: #{tpu_custom_call.1} parent=1 // pred_check
      _
    $region3: #{tpu_custom_call.1} parent=1 // pred_check_branch
      %19 = sbr.rel (0) target = $region5
    $region4: #{tpu_custom_call.1} parent=1 // pred_region
      %s21 = ssub.s32 256, 256
      %22 = vsyncadd [#allocation3], %s21
      %s23 = sshll.u32 [#allocation2], 4
      %s24 = int_to_ptr.vmem [resolvable:$true] %s23
      %29 = dma.hbm_to_vmem [thread:$0]  %s0, 256, %s24, [#allocation3], 128, 128, 8
    $region5: #{tpu_custom_call.1} parent=1 // pred_fallthru
      _
    // Predicated region
    $region6: #{tpu_custom_call.1} parent=1 // pred_check
      _
    $region7: #{tpu_custom_call.1} parent=1 // pred_check_branch
      %31 = sbr.rel (0) target = $region9
    $region8: #{tpu_custom_call.1} parent=1 // pred_region
      %s33 = ssub.s32 1024, 1024
      %34 = vsyncadd [#allocation6], %s33
      %s35 = sshll.u32 [#allocation5], 4
      %s36 = int_to_ptr.vmem [resolvable:$true] %s35
      %41 = dma.hbm_to_vmem [thread:$0]  %s1, 1024, %s36, [#allocation6], 64, 64, 4
    $region9: #{tpu_custom_call.1} parent=1 // pred_fallthru
      _
    // Predicated region
    $region10: #{tpu_custom_call.1} parent=1 // pred_check
      _
    $region11: #{tpu_custom_call.1} parent=1 // pred_check_branch
      %43 = sbr.rel (0) target = $region13
    $region12: #{tpu_custom_call.1} parent=1 // pred_region
      _
    $region13: #{tpu_custom_call.1} parent=1 // pred_fallthru
      _
    // Predicated region
    $region14: #{tpu_custom_call.1} parent=1 // pred_check
      _
    $region15: #{tpu_custom_call.1} parent=1 // pred_check_branch
      %45 = sbr.rel (0) target = $region17
    $region16: #{tpu_custom_call.1} parent=1 // pred_region
      %s47 = ssub.s32 1024, 1024
      %48 = vsyncadd [#allocation6], %s47
      %s49 = sshll.u32 [#allocation7], 4
      %s50 = int_to_ptr.vmem [resolvable:$true] %s49
      %55 = dma.hbm_to_vmem [thread:$0]  %s3, 1024, %s50, [#allocation6], 64, 64, 4
    $region17: #{tpu_custom_call.1} parent=1 // pred_fallthru
      _
    // Predicated region
    $region18: #{tpu_custom_call.1} parent=1 // pred_check
      _
    $region19: #{tpu_custom_call.1} parent=1 // pred_check_branch
      %57 = sbr.rel (0) target = $region21
    $region20: #{tpu_custom_call.1} parent=1 // pred_region
      _
    $region21: #{tpu_custom_call.1} parent=1 // pred_fallthru
      _
    // Predicated region
    $region22: #{tpu_custom_call.1} parent=1 // pred_check
      _
    $region23: #{tpu_custom_call.1} parent=1 // pred_check_branch
      %59 = sbr.rel (0) target = $region25
    $region24: #{tpu_custom_call.1} parent=1 // pred_region
      %s61 = ssub.s32 1024, 1024
      %62 = vsyncadd [#allocation9], %s61
      %s63 = sshll.u32 [#allocation8], 4
      %s64 = int_to_ptr.vmem [resolvable:$true] %s63
      %69 = dma.hbm_to_vmem [thread:$0]  %s5, 1024, %s64, [#allocation9], 64, 64, 4
    $region25: #{tpu_custom_call.1} parent=1 // pred_fallthru
      _
    // Predicated region
    $region26: #{tpu_custom_call.1} parent=1 // pred_check
      _
    $region27: #{tpu_custom_call.1} parent=1 // pred_check_branch
      %71 = sbr.rel (0) target = $region29
    $region28: #{tpu_custom_call.1} parent=1 // pred_region
      _
    $region29: #{tpu_custom_call.1} parent=1 // pred_fallthru
      _
    // Predicated region
    $region30: #{tpu_custom_call.1} parent=1 // pred_check
      _
    $region31: #{tpu_custom_call.1} parent=1 // pred_check_branch
      %73 = sbr.rel (0) target = $region33
    $region32: #{tpu_custom_call.1} parent=1 // pred_region
      %s75 = ssub.s32 1024, 1024
      %76 = vsyncadd [#allocation9], %s75
      %s77 = sshll.u32 [#allocation10], 4
      %s78 = int_to_ptr.vmem [resolvable:$true] %s77
      %83 = dma.hbm_to_vmem [thread:$0]  %s7, 1024, %s78, [#allocation9], 64, 64, 4
    $region33: #{tpu_custom_call.1} parent=1 // pred_fallthru
      _
    // Predicated region
    $region34: #{tpu_custom_call.1} parent=1 // pred_check
      _
    $region35: #{tpu_custom_call.1} parent=1 // pred_check_branch
      %85 = sbr.rel (0) target = $region37
    $region36: #{tpu_custom_call.1} parent=1 // pred_region
      _
    $region37: #{tpu_custom_call.1} parent=1 // pred_fallthru
      _
    // Predicated region
    $region38: #{tpu_custom_call.1} parent=1 // pred_check
      _
    $region39: #{tpu_custom_call.1} parent=1 // pred_check_branch
      %87 = sbr.rel (0) target = $region41
    $region40: #{tpu_custom_call.1} parent=1 // pred_region
      %88 = dma.done [#allocation3], 256
    $region41: #{tpu_custom_call.1} parent=1 // pred_fallthru
      _
    // Predicated region
    $region42: #{tpu_custom_call.1} parent=1 // pred_check
      _
    $region43: #{tpu_custom_call.1} parent=1 // pred_check_branch
      %90 = sbr.rel (0) target = $region45
    $region44: #{tpu_custom_call.1} parent=1 // pred_region
      %91 = dma.done [#allocation6], 1024
    $region45: #{tpu_custom_call.1} parent=1 // pred_fallthru
      _
    // Predicated region
    $region46: #{tpu_custom_call.1} parent=1 // pred_check
      _
    $region47: #{tpu_custom_call.1} parent=1 // pred_check_branch
      %93 = sbr.rel (0) target = $region49
    $region48: #{tpu_custom_call.1} parent=1 // pred_region
      %94 = dma.done [#allocation6], 1024
    $region49: #{tpu_custom_call.1} parent=1 // pred_fallthru
      _
    // Predicated region
    $region50: #{tpu_custom_call.1} parent=1 // pred_check
      _
    $region51: #{tpu_custom_call.1} parent=1 // pred_check_branch
      %96 = sbr.rel (0) target = $region53
    $region52: #{tpu_custom_call.1} parent=1 // pred_region
      %97 = dma.done [#allocation9], 1024
    $region53: #{tpu_custom_call.1} parent=1 // pred_fallthru
      _
    // Predicated region
    $region54: #{tpu_custom_call.1} parent=1 // pred_check
      _
    $region55: #{tpu_custom_call.1} parent=1 // pred_check_branch
      %99 = sbr.rel (0) target = $region57
    $region56: #{tpu_custom_call.1} parent=1 // pred_region
      %100 = dma.done [#allocation9], 1024
    $region57: #{tpu_custom_call.1} parent=1 // pred_fallthru
      _
    %v102 = vld [vmem:[#allocation2] sm:$0xff]
    %v103 = vld [vmem:[#allocation2 + $0x8] sm:$0xff]
    %v104 = vpack.c.bf16 %v103, %v102
    %v105 = vld [vmem:[#allocation5] sm:$0xf]
    %v106 = vld [vmem:[#allocation5 + $0x4] sm:$0xf]
    %v107 = vld [vmem:[#allocation5 + $0x8] sm:$0xf]
    %v108 = vld [vmem:[#allocation5 + $0xc] sm:$0xf]
    %v109 = vld [vmem:[#allocation5 + $0x10] sm:$0xf]
    %v110 = vld [vmem:[#allocation5 + $0x14] sm:$0xf]
    %v111 = vld [vmem:[#allocation5 + $0x18] sm:$0xf]
    %v112 = vld [vmem:[#allocation5 + $0x1c] sm:$0xf]
    %v113 = vld [vmem:[#allocation5 + $0x20] sm:$0xf]
    %v114 = vld [vmem:[#allocation5 + $0x24] sm:$0xf]
    %v115 = vld [vmem:[#allocation5 + $0x28] sm:$0xf]
    %v116 = vld [vmem:[#allocation5 + $0x2c] sm:$0xf]
    %v117 = vld [vmem:[#allocation5 + $0x30] sm:$0xf]
    %v118 = vld [vmem:[#allocation5 + $0x34] sm:$0xf]
    %v119 = vld [vmem:[#allocation5 + $0x38] sm:$0xf]
    %v120 = vld [vmem:[#allocation5 + $0x3c] sm:$0xf]
    %v121 = vld [vmem:[%s2] sm:$0x1]
    %v123 = vlaneseq
    %v124 = vshrl.u32 %v123, 7
    %v125 = vsub.s32 0, %v124
    %v126 = vrot.slane %v121, %v125
    %v144 = vunpack.c.l.b16 %v105
    %v145 = vunpack.c.l.b16 %v106
    %v146 = vunpack.c.l.b16 %v107
    %v147 = vunpack.c.l.b16 %v108
    %v148 = vunpack.c.l.b16 %v109
    %v149 = vunpack.c.l.b16 %v110
    %v150 = vunpack.c.l.b16 %v111
    %v151 = vunpack.c.l.b16 %v112
    %v152 = vunpack.c.l.b16 %v113
    %v153 = vunpack.c.l.b16 %v114
    %v154 = vunpack.c.l.b16 %v115
    %v155 = vunpack.c.l.b16 %v116
    %v156 = vunpack.c.l.b16 %v117
    %v157 = vunpack.c.l.b16 %v118
    %v158 = vunpack.c.l.b16 %v119
    %v159 = vunpack.c.l.b16 %v120
    %v160 = vpack.c.b16 %v145, %v144
    %v161 = vpack.c.b16 %v147, %v146
    %v162 = vpack.c.b16 %v149, %v148
    %v163 = vpack.c.b16 %v151, %v150
    %v164 = vpack.c.b16 %v153, %v152
    %v165 = vpack.c.b16 %v155, %v154
    %v166 = vpack.c.b16 %v157, %v156
    %v167 = vpack.c.b16 %v159, %v158
    %176 = vmatprep.subr.bf16.mxu0 0
    %177 = vmatpush1.bf16.msra.mxu0 %v167
    %178 = vmatprep.subr.bf16.mxu0 0
    %179 = vmatpush1.bf16.msra.mxu0 %v166
    %180 = vmatprep.subr.bf16.mxu0 0
    %181 = vmatpush1.bf16.msra.mxu0 %v165
    %182 = vmatprep.subr.bf16.mxu0 0
    %183 = vmatpush1.bf16.msra.mxu0 %v164
    %184 = vmatprep.subr.bf16.mxu0 0
    %185 = vmatpush1.bf16.msra.mxu0 %v163
    %186 = vmatprep.subr.bf16.mxu0 0
    %187 = vmatpush1.bf16.msra.mxu0 %v162
    %188 = vmatprep.subr.bf16.mxu0 0
    %189 = vmatpush1.bf16.msra.mxu0 %v161
    %190 = vmatprep.subr.bf16.mxu0 0
    %191 = vmatpush1.bf16.msra.mxu0 %v160
    %192 = vmatprep.subr.bf16.mxu0 0
    %193 = vmatpush2.bf16.msra.mxu0 0
    %194 = vmatprep.subr.bf16.mxu0 0
    %195 = vmatpush2.bf16.msra.mxu0 0
    %196 = vmatprep.subr.bf16.mxu0 0
    %197 = vmatpush2.bf16.msra.mxu0 0
    %198 = vmatprep.subr.bf16.mxu0 0
    %199 = vmatpush2.bf16.msra.mxu0 0
    %200 = vmatprep.subr.bf16.mxu0 0
    %201 = vmatpush2.bf16.msra.mxu0 0
    %202 = vmatprep.subr.bf16.mxu0 0
    %203 = vmatpush2.bf16.msra.mxu0 0
    %204 = vmatprep.subr.bf16.mxu0 0
    %205 = vmatpush2.bf16.msra.mxu0 0
    %206 = vmatprep.subr.bf16.mxu0 0
    %207 = vmatpush2.bf16.msra.mxu0 0
    %208 = vmatprep.mubr.bf16.mxu0 0
    %209 = vmatmul.mubr.bf16.gmra.mxu0 %v104
    %v210 = vpop.f32.mrf.mxu0
    %v211 = vadd.f32 %v126, %v210
    %v212 = vpop.f32.mrf.mxu0
    %v213 = vpop.f32.mrf.mxu0
    %v214 = vadd.f32 %v126, %v213
    %v215 = vpop.f32.mrf.mxu0
    %216 = vdwg.mxu0
    %v217 = vmax.f32 %v211, 0.0
    %v218 = vmax.f32 %v214, 0.0
    %v219 = vpack.c.bf16 %v218, %v217
    %v220 = vld [vmem:[#allocation7] sm:$0xf]
    %v221 = vld [vmem:[#allocation7 + $0x4] sm:$0xf]
    %v222 = vld [vmem:[#allocation7 + $0x8] sm:$0xf]
    %v223 = vld [vmem:[#allocation7 + $0xc] sm:$0xf]
    %v224 = vld [vmem:[#allocation7 + $0x10] sm:$0xf]
    %v225 = vld [vmem:[#allocation7 + $0x14] sm:$0xf]
    %v226 = vld [vmem:[#allocation7 + $0x18] sm:$0xf]
    %v227 = vld [vmem:[#allocation7 + $0x1c] sm:$0xf]
    %v228 = vld [vmem:[#allocation7 + $0x20] sm:$0xf]
    %v229 = vld [vmem:[#allocation7 + $0x24] sm:$0xf]
    %v230 = vld [vmem:[#allocation7 + $0x28] sm:$0xf]
    %v231 = vld [vmem:[#allocation7 + $0x2c] sm:$0xf]
    %v232 = vld [vmem:[#allocation7 + $0x30] sm:$0xf]
    %v233 = vld [vmem:[#allocation7 + $0x34] sm:$0xf]
    %v234 = vld [vmem:[#allocation7 + $0x38] sm:$0xf]
    %v235 = vld [vmem:[#allocation7 + $0x3c] sm:$0xf]
    %v236 = vld [vmem:[%s4] sm:$0x1]
    %v238 = vlaneseq
    %v239 = vshrl.u32 %v238, 7
    %v240 = vsub.s32 0, %v239
    %v241 = vrot.slane %v236, %v240
    %v259 = vunpack.c.l.b16 %v220
    %v260 = vunpack.c.l.b16 %v221
    %v261 = vunpack.c.l.b16 %v222
    %v262 = vunpack.c.l.b16 %v223
    %v263 = vunpack.c.l.b16 %v224
    %v264 = vunpack.c.l.b16 %v225
    %v265 = vunpack.c.l.b16 %v226
    %v266 = vunpack.c.l.b16 %v227
    %v267 = vunpack.c.l.b16 %v228
    %v268 = vunpack.c.l.b16 %v229
    %v269 = vunpack.c.l.b16 %v230
    %v270 = vunpack.c.l.b16 %v231
    %v271 = vunpack.c.l.b16 %v232
    %v272 = vunpack.c.l.b16 %v233
    %v273 = vunpack.c.l.b16 %v234
    %v274 = vunpack.c.l.b16 %v235
    %v275 = vpack.c.b16 %v260, %v259
    %v276 = vpack.c.b16 %v262, %v261
    %v277 = vpack.c.b16 %v264, %v263
    %v278 = vpack.c.b16 %v266, %v265
    %v279 = vpack.c.b16 %v268, %v267
    %v280 = vpack.c.b16 %v270, %v269
    %v281 = vpack.c.b16 %v272, %v271
    %v282 = vpack.c.b16 %v274, %v273
    %291 = vmatprep.subr.bf16.mxu0 0
    %292 = vmatpush1.bf16.msra.mxu0 %v282
    %293 = vmatprep.subr.bf16.mxu0 0
    %294 = vmatpush1.bf16.msra.mxu0 %v281
    %295 = vmatprep.subr.bf16.mxu0 0
    %296 = vmatpush1.bf16.msra.mxu0 %v280
    %297 = vmatprep.subr.bf16.mxu0 0
    %298 = vmatpush1.bf16.msra.mxu0 %v279
    %299 = vmatprep.subr.bf16.mxu0 0
    %300 = vmatpush1.bf16.msra.mxu0 %v278
    %301 = vmatprep.subr.bf16.mxu0 0
    %302 = vmatpush1.bf16.msra.mxu0 %v277
    %303 = vmatprep.subr.bf16.mxu0 0
    %304 = vmatpush1.bf16.msra.mxu0 %v276
    %305 = vmatprep.subr.bf16.mxu0 0
    %306 = vmatpush1.bf16.msra.mxu0 %v275
    %307 = vmatprep.subr.bf16.mxu0 0
    %308 = vmatpush2.bf16.msra.mxu0 0
    %309 = vmatprep.subr.bf16.mxu0 0
    %310 = vmatpush2.bf16.msra.mxu0 0
    %311 = vmatprep.subr.bf16.mxu0 0
    %312 = vmatpush2.bf16.msra.mxu0 0
    %313 = vmatprep.subr.bf16.mxu0 0
    %314 = vmatpush2.bf16.msra.mxu0 0
    %315 = vmatprep.subr.bf16.mxu0 0
    %316 = vmatpush2.bf16.msra.mxu0 0
    %317 = vmatprep.subr.bf16.mxu0 0
    %318 = vmatpush2.bf16.msra.mxu0 0
    %319 = vmatprep.subr.bf16.mxu0 0
    %320 = vmatpush2.bf16.msra.mxu0 0
    %321 = vmatprep.subr.bf16.mxu0 0
    %322 = vmatpush2.bf16.msra.mxu0 0
    %323 = vmatprep.mubr.bf16.mxu0 0
    %324 = vmatmul.mubr.bf16.gmra.mxu0 %v219
    %v325 = vpop.f32.mrf.mxu0
    %v326 = vadd.f32 %v241, %v325
    %v327 = vpop.f32.mrf.mxu0
    %v328 = vpop.f32.mrf.mxu0
    %v329 = vadd.f32 %v241, %v328
    %v330 = vpop.f32.mrf.mxu0
    %331 = vdwg.mxu0
    %v332 = vmax.f32 %v326, 0.0
    %v333 = vmax.f32 %v329, 0.0
    %v334 = vpack.c.bf16 %v333, %v332
    %v335 = vld [vmem:[#allocation8] sm:$0xf]
    %v336 = vld [vmem:[#allocation8 + $0x4] sm:$0xf]
    %v337 = vld [vmem:[#allocation8 + $0x8] sm:$0xf]
    %v338 = vld [vmem:[#allocation8 + $0xc] sm:$0xf]
    %v339 = vld [vmem:[#allocation8 + $0x10] sm:$0xf]
    %v340 = vld [vmem:[#allocation8 + $0x14] sm:$0xf]
    %v341 = vld [vmem:[#allocation8 + $0x18] sm:$0xf]
    %v342 = vld [vmem:[#allocation8 + $0x1c] sm:$0xf]
    %v343 = vld [vmem:[#allocation8 + $0x20] sm:$0xf]
    %v344 = vld [vmem:[#allocation8 + $0x24] sm:$0xf]
    %v345 = vld [vmem:[#allocation8 + $0x28] sm:$0xf]
    %v346 = vld [vmem:[#allocation8 + $0x2c] sm:$0xf]
    %v347 = vld [vmem:[#allocation8 + $0x30] sm:$0xf]
    %v348 = vld [vmem:[#allocation8 + $0x34] sm:$0xf]
    %v349 = vld [vmem:[#allocation8 + $0x38] sm:$0xf]
    %v350 = vld [vmem:[#allocation8 + $0x3c] sm:$0xf]
    %v351 = vld [vmem:[%s6] sm:$0x1]
    %v353 = vlaneseq
    %v354 = vshrl.u32 %v353, 7
    %v355 = vsub.s32 0, %v354
    %v356 = vrot.slane %v351, %v355
    %v374 = vunpack.c.l.b16 %v335
    %v375 = vunpack.c.l.b16 %v336
    %v376 = vunpack.c.l.b16 %v337
    %v377 = vunpack.c.l.b16 %v338
    %v378 = vunpack.c.l.b16 %v339
    %v379 = vunpack.c.l.b16 %v340
    %v380 = vunpack.c.l.b16 %v341
    %v381 = vunpack.c.l.b16 %v342
    %v382 = vunpack.c.l.b16 %v343
    %v383 = vunpack.c.l.b16 %v344
    %v384 = vunpack.c.l.b16 %v345
    %v385 = vunpack.c.l.b16 %v346
    %v386 = vunpack.c.l.b16 %v347
    %v387 = vunpack.c.l.b16 %v348
    %v388 = vunpack.c.l.b16 %v349
    %v389 = vunpack.c.l.b16 %v350
    %v390 = vpack.c.b16 %v375, %v374
    %v391 = vpack.c.b16 %v377, %v376
    %v392 = vpack.c.b16 %v379, %v378
    %v393 = vpack.c.b16 %v381, %v380
    %v394 = vpack.c.b16 %v383, %v382
    %v395 = vpack.c.b16 %v385, %v384
    %v396 = vpack.c.b16 %v387, %v386
    %v397 = vpack.c.b16 %v389, %v388
    %406 = vmatprep.subr.bf16.mxu0 0
    %407 = vmatpush1.bf16.msra.mxu0 %v397
    %408 = vmatprep.subr.bf16.mxu0 0
    %409 = vmatpush1.bf16.msra.mxu0 %v396
    %410 = vmatprep.subr.bf16.mxu0 0
    %411 = vmatpush1.bf16.msra.mxu0 %v395
    %412 = vmatprep.subr.bf16.mxu0 0
    %413 = vmatpush1.bf16.msra.mxu0 %v394
    %414 = vmatprep.subr.bf16.mxu0 0
    %415 = vmatpush1.bf16.msra.mxu0 %v393
    %416 = vmatprep.subr.bf16.mxu0 0
    %417 = vmatpush1.bf16.msra.mxu0 %v392
    %418 = vmatprep.subr.bf16.mxu0 0
    %419 = vmatpush1.bf16.msra.mxu0 %v391
    %420 = vmatprep.subr.bf16.mxu0 0
    %421 = vmatpush1.bf16.msra.mxu0 %v390
    %422 = vmatprep.subr.bf16.mxu0 0
    %423 = vmatpush2.bf16.msra.mxu0 0
    %424 = vmatprep.subr.bf16.mxu0 0
    %425 = vmatpush2.bf16.msra.mxu0 0
    %426 = vmatprep.subr.bf16.mxu0 0
    %427 = vmatpush2.bf16.msra.mxu0 0
    %428 = vmatprep.subr.bf16.mxu0 0
    %429 = vmatpush2.bf16.msra.mxu0 0
    %430 = vmatprep.subr.bf16.mxu0 0
    %431 = vmatpush2.bf16.msra.mxu0 0
    %432 = vmatprep.subr.bf16.mxu0 0
    %433 = vmatpush2.bf16.msra.mxu0 0
    %434 = vmatprep.subr.bf16.mxu0 0
    %435 = vmatpush2.bf16.msra.mxu0 0
    %436 = vmatprep.subr.bf16.mxu0 0
    %437 = vmatpush2.bf16.msra.mxu0 0
    %438 = vmatprep.mubr.bf16.mxu0 0
    %439 = vmatmul.mubr.bf16.gmra.mxu0 %v334
    %v440 = vpop.f32.mrf.mxu0
    %v441 = vadd.f32 %v356, %v440
    %v442 = vpop.f32.mrf.mxu0
    %v443 = vpop.f32.mrf.mxu0
    %v444 = vadd.f32 %v356, %v443
    %v445 = vpop.f32.mrf.mxu0
    %446 = vdwg.mxu0
    %v447 = vmax.f32 %v441, 0.0
    %v448 = vmax.f32 %v444, 0.0
    %v449 = vpack.c.bf16 %v448, %v447
    %v450 = vld [vmem:[#allocation10] sm:$0xf]
    %v451 = vld [vmem:[#allocation10 + $0x4] sm:$0xf]
    %v452 = vld [vmem:[#allocation10 + $0x8] sm:$0xf]
    %v453 = vld [vmem:[#allocation10 + $0xc] sm:$0xf]
    %v454 = vld [vmem:[#allocation10 + $0x10] sm:$0xf]
    %v455 = vld [vmem:[#allocation10 + $0x14] sm:$0xf]
    %v456 = vld [vmem:[#allocation10 + $0x18] sm:$0xf]
    %v457 = vld [vmem:[#allocation10 + $0x1c] sm:$0xf]
    %v458 = vld [vmem:[#allocation10 + $0x20] sm:$0xf]
    %v459 = vld [vmem:[#allocation10 + $0x24] sm:$0xf]
    %v460 = vld [vmem:[#allocation10 + $0x28] sm:$0xf]
    %v461 = vld [vmem:[#allocation10 + $0x2c] sm:$0xf]
    %v462 = vld [vmem:[#allocation10 + $0x30] sm:$0xf]
    %v463 = vld [vmem:[#allocation10 + $0x34] sm:$0xf]
    %v464 = vld [vmem:[#allocation10 + $0x38] sm:$0xf]
    %v465 = vld [vmem:[#allocation10 + $0x3c] sm:$0xf]
    %v466 = vld [vmem:[%s8] sm:$0x1]
    %v468 = vlaneseq
    %v469 = vshrl.u32 %v468, 7
    %v470 = vsub.s32 0, %v469
    %v471 = vrot.slane %v466, %v470
    %v489 = vunpack.c.l.b16 %v450
    %v490 = vunpack.c.l.b16 %v451
    %v491 = vunpack.c.l.b16 %v452
    %v492 = vunpack.c.l.b16 %v453
    %v493 = vunpack.c.l.b16 %v454
    %v494 = vunpack.c.l.b16 %v455
    %v495 = vunpack.c.l.b16 %v456
    %v496 = vunpack.c.l.b16 %v457
    %v497 = vunpack.c.l.b16 %v458
    %v498 = vunpack.c.l.b16 %v459
    %v499 = vunpack.c.l.b16 %v460
    %v500 = vunpack.c.l.b16 %v461
    %v501 = vunpack.c.l.b16 %v462
    %v502 = vunpack.c.l.b16 %v463
    %v503 = vunpack.c.l.b16 %v464
    %v504 = vunpack.c.l.b16 %v465
    %v505 = vpack.c.b16 %v490, %v489
    %v506 = vpack.c.b16 %v492, %v491
    %v507 = vpack.c.b16 %v494, %v493
    %v508 = vpack.c.b16 %v496, %v495
    %v509 = vpack.c.b16 %v498, %v497
    %v510 = vpack.c.b16 %v500, %v499
    %v511 = vpack.c.b16 %v502, %v501
    %v512 = vpack.c.b16 %v504, %v503
    %521 = vmatprep.subr.bf16.mxu0 0
    %522 = vmatpush1.bf16.msra.mxu0 %v512
    %523 = vmatprep.subr.bf16.mxu0 0
    %524 = vmatpush1.bf16.msra.mxu0 %v511
    %525 = vmatprep.subr.bf16.mxu0 0
    %526 = vmatpush1.bf16.msra.mxu0 %v510
    %527 = vmatprep.subr.bf16.mxu0 0
    %528 = vmatpush1.bf16.msra.mxu0 %v509
    %529 = vmatprep.subr.bf16.mxu0 0
    %530 = vmatpush1.bf16.msra.mxu0 %v508
    %531 = vmatprep.subr.bf16.mxu0 0
    %532 = vmatpush1.bf16.msra.mxu0 %v507
    %533 = vmatprep.subr.bf16.mxu0 0
    %534 = vmatpush1.bf16.msra.mxu0 %v506
    %535 = vmatprep.subr.bf16.mxu0 0
    %536 = vmatpush1.bf16.msra.mxu0 %v505
    %537 = vmatprep.subr.bf16.mxu0 0
    %538 = vmatpush2.bf16.msra.mxu0 0
    %539 = vmatprep.subr.bf16.mxu0 0
    %540 = vmatpush2.bf16.msra.mxu0 0
    %541 = vmatprep.subr.bf16.mxu0 0
    %542 = vmatpush2.bf16.msra.mxu0 0
    %543 = vmatprep.subr.bf16.mxu0 0
    %544 = vmatpush2.bf16.msra.mxu0 0
    %545 = vmatprep.subr.bf16.mxu0 0
    %546 = vmatpush2.bf16.msra.mxu0 0
    %547 = vmatprep.subr.bf16.mxu0 0
    %548 = vmatpush2.bf16.msra.mxu0 0
    %549 = vmatprep.subr.bf16.mxu0 0
    %550 = vmatpush2.bf16.msra.mxu0 0
    %551 = vmatprep.subr.bf16.mxu0 0
    %552 = vmatpush2.bf16.msra.mxu0 0
    %553 = vmatprep.mubr.bf16.mxu0 0
    %554 = vmatmul.mubr.bf16.gmra.mxu0 %v449
    %v555 = vpop.f32.mrf.mxu0
    %v556 = vadd.f32 %v471, %v555
    %v557 = vpop.f32.mrf.mxu0
    %v558 = vpop.f32.mrf.mxu0
    %v559 = vadd.f32 %v471, %v558
    %v560 = vpop.f32.mrf.mxu0
    %561 = vdwg.mxu0
    %562 = vst [vmem:[#allocation11] sm:$0xff] %v556
    %563 = vst [vmem:[#allocation11 + $0x8] sm:$0xff] %v559
    // Predicated region
    $region58: #{tpu_custom_call.1} parent=1 // pred_check
      _
    $region59: #{tpu_custom_call.1} parent=1 // pred_check_branch
      %565 = sbr.rel (0) target = $region61
    $region60: #{tpu_custom_call.1} parent=1 // pred_region
      %s567 = ssub.s32 256, 256
      %568 = vsyncadd [#allocation4], %s567
      %s569 = sshll.u32 [#allocation11], 4
      %s570 = int_to_ptr.vmem [resolvable:$true] %s569
      %575 = dma.vmem_to_hbm [thread:$0]  %s570, 256, %s9, [#allocation4], 128, 128, 8
    $region61: #{tpu_custom_call.1} parent=1 // pred_fallthru
      _
    // Predicated region
    $region62: #{tpu_custom_call.1} parent=1 // pred_check
      _
    $region63: #{tpu_custom_call.1} parent=1 // pred_check_branch
      %577 = sbr.rel (0) target = $region65
    $region64: #{tpu_custom_call.1} parent=1 // pred_region
      %578 = dma.done [#allocation4], 256
    $region65: #{tpu_custom_call.1} parent=1 // pred_fallthru
      _
    %579 = vsyncpa [#allocation3], 1
    %580 = vsyncpa [#allocation6], 1
    %581 = vsyncpa [#allocation9], 1
    %582 = vsyncpa [#allocation4], 1

</llo_original>
